<compile_context>
chip_gen: v5e
topology: v5e:2x2
jax: 0.10.0
libtpu: 0.0.40
codegen_flags: <defaults>
</compile_context>

<pallas_src>
import functools

import jax
import jax.numpy as jnp
from jax.experimental import pallas as pl
from jax.experimental.pallas import tpu as pltpu

_LANE = 128
_VMEM_LIMIT_BYTES = 48 * 1024 * 1024   # explicit scoped-VMEM limit (v5e default: 16 MiB)
_TILE_CAP_ROWS = 4096                  # upper bound on rows per grid step


def _round_up(x, m):
    return ((x + m - 1) // m) * m


def _fusion_kernel(*refs, num_clients, conc, fuse_k):
    # refs = (x_0, ..., x_{C-1}, w, b, o)
    #   x_c: [TILE_B, D]      per-client activation tile
    #   w  : [Cw, D, N_pad]   Cw == C for 'conc', 1 for 'sum'/'mean'
    #   b  : [1, N_pad]       float32 (accumulation dtype)
    #   o  : [TILE_B, N_pad]
    x_refs = refs[:num_clients]
    w_ref, b_ref, o_ref = refs[num_clients:]

    if conc:
        if fuse_k:
            # Lane-aligned cut_dim: build the concatenated tile in vregs and do
            # ONE MXU dot over K = C*D (single push/drain, K >= 128).
            xcat = jnp.concatenate([x_refs[c][...] for c in range(num_clients)],
                                   axis=-1)
            if xcat.dtype != w_ref.dtype:
                xcat = xcat.astype(w_ref.dtype)
            c_w, d_w, n_pad = w_ref.shape
            w2d = w_ref[...].reshape(c_w * d_w, n_pad)  # leading-dim merge: free
            acc = jnp.dot(xcat, w2d, preferred_element_type=jnp.float32)
        else:
            # Misaligned cut_dim: concat handled algebraically,
            # logits = sum_c x_c @ W_c  (f32 accumulation on the MXU).
            def one(c):
                x = x_refs[c][...]
                if x.dtype != w_ref.dtype:
                    x = x.astype(w_ref.dtype)
                return jnp.dot(x, w_ref[c], preferred_element_type=jnp.float32)
            acc = one(0)
            for c in range(1, num_clients):
                acc = acc + one(c)
    else:
        # 'sum'/'mean': client-sum in f32 (mean scale already folded into w),
        # then one MXU matmul in the weight's native dtype, f32 accumulation.
        pooled = x_refs[0][...].astype(jnp.float32)
        for c in range(1, num_clients):
            pooled = pooled + x_refs[c][...].astype(jnp.float32)
        if pooled.dtype != w_ref.dtype:
            pooled = pooled.astype(w_ref.dtype)
        acc = jnp.dot(pooled, w_ref[0], preferred_element_type=jnp.float32)

    # Bias is stored in f32, so this add needs no cast.
    o_ref[...] = (acc + b_ref[...]).astype(o_ref.dtype)


def prepare_fusion_params(weight, bias, aggregation, num_clients, cut_dim,
                          param_dtype=None):
    """One-time parameter prep (NOT in the per-step hot path).

    weight : [num_classes, fusion_input_dim]  (PyTorch nn.Linear layout)
    bias   : [num_classes]
    param_dtype : optional storage dtype for the weight (e.g. jnp.bfloat16) -
                  the kernel is HBM-bound, so bf16 weights are ~free accuracy
                  loss for halved traffic.  Accumulation stays f32.

    Returns (w_prep [Cw, cut_dim, N_pad], b_prep [1, N_pad] float32).
    Padded weight columns / bias entries are zero, so padded logits are 0.
    """
    num_classes = weight.shape[0]
    n_pad = _round_up(num_classes, _LANE)

    if aggregation == "conc":
        assert weight.shape[1] == num_clients * cut_dim, (
            "conc: weight must be [num_classes, num_clients*cut_dim]")
        w = weight.reshape(num_classes, num_clients, cut_dim)   # [N, C, D]
        w = jnp.transpose(w, (1, 2, 0))                         # [C, D, N]
    elif aggregation in ("sum", "mean"):
        assert weight.shape[1] == cut_dim
        scale = (1.0 / num_clients) if aggregation == "mean" else 1.0
        w = (weight * scale).T[None, :, :]                      # [1, D, N]
    else:
        raise ValueError(f"unknown aggregation {aggregation!r}")

    w = jnp.pad(w, ((0, 0), (0, 0), (0, n_pad - num_classes)))
    if param_dtype is not None:
        w = w.astype(param_dtype)
    b = jnp.pad(bias.astype(jnp.float32), (0, n_pad - num_classes))
    return w, b.reshape(1, n_pad)


def _choose_tile_b(batch, row_bytes, resident_bytes, unit):
    """Pick (tile_b, num_tiles, padded_batch).

    tile_b is sized so double-buffered inputs/outputs + the resident weight fit
    roughly half the scoped VMEM, capped at _TILE_CAP_ROWS.  Whenever
    batch >= 2*unit we force >= 2 grid steps so v7x's two TensorCores both get
    work ("parallel" batch axis)."""
    budget = max(unit * row_bytes, _VMEM_LIMIT_BYTES // 2 - resident_bytes)
    cap = max(unit, min(_TILE_CAP_ROWS, budget // max(row_bytes, 1)))
    cap -= cap % unit
    pad_b = _round_up(batch, unit)
    if pad_b <= cap:
        num_tiles = 2 if pad_b >= 2 * unit else 1
    else:
        num_tiles = pl.cdiv(pad_b, cap)
    tile_b = _round_up(pl.cdiv(pad_b, num_tiles), unit)
    num_tiles = pl.cdiv(pad_b, tile_b)
    return tile_b, num_tiles, tile_b * num_tiles


def fusion_forward(client_xs, w_prep, b_prep, num_classes, aggregation="mean",
                   out_dtype=jnp.float32, return_padded=False):
    """Pallas equivalent of FusionModel.forward.

    client_xs      : list of [batch, cut_dim] arrays (one per client)
    w_prep, b_prep : outputs of prepare_fusion_params
    return_padded  : if True, return [padded_batch, n_pad] logits (padded
                     classes are 0) and skip the wrapper-side slice pass.
    """
    num_clients = len(client_xs)
    batch, cut_dim = client_xs[0].shape
    c_w, d_w, n_pad = w_prep.shape
    conc = aggregation == "conc"
    assert d_w == cut_dim
    assert c_w == (num_clients if conc else 1)
    assert b_prep.shape == (1, n_pad)

    x_it = client_xs[0].dtype.itemsize
    out_it = jnp.dtype(out_dtype).itemsize
    w_bytes = int(w_prep.size) * w_prep.dtype.itemsize
    b_bytes = int(b_prep.size) * b_prep.dtype.itemsize

    # Per-row VMEM footprint: double-buffered inputs + double-buffered output
    # + slack for in-flight f32 values (pooled / concat / accumulator).
    row_bytes = (2 * num_clients * cut_dim * x_it
                 + 2 * n_pad * out_it
                 + num_clients * cut_dim * 4 + n_pad * 4)
    unit = 8 if x_it >= 4 else (16 if x_it == 2 else 32)
    tile_b, num_tiles, padded_batch = _choose_tile_b(
        batch, row_bytes, w_bytes + b_bytes, unit)

    if padded_batch != batch:
        # Ragged batch: zero-pad to a multiple of the tile (wrapper-side pass,
        # only taken when needed).  Padded rows are sliced off below.
        pad = padded_batch - batch
        client_xs = [jnp.pad(x, ((0, pad), (0, 0))) for x in client_xs]

    fuse_k = conc and (cut_dim % _LANE == 0)
    kernel = functools.partial(_fusion_kernel, num_clients=num_clients,
                               conc=conc, fuse_k=fuse_k)

    x_bytes = padded_batch * num_clients * cut_dim * x_it
    cost = pl.CostEstimate(
        flops=2 * padded_batch * (c_w * d_w) * n_pad,
        transcendentals=0,
        bytes_accessed=x_bytes + w_bytes + b_bytes
        + padded_batch * n_pad * out_it,
    )

    def _build(weight_buffer_count):
        wb_kwargs = ({} if weight_buffer_count is None
                     else dict(pipeline_mode=pl.Buffered(weight_buffer_count)))
        in_specs = [pl.BlockSpec((tile_b, cut_dim), lambda i: (i, 0))
                    for _ in range(num_clients)]
        # Weight/bias are grid-invariant: single-buffer them (no re-DMA, half
        # the resident footprint -> matters on v7x's 64 MiB VMEM).
        in_specs.append(pl.BlockSpec((c_w, d_w, n_pad), lambda i: (0, 0, 0),
                                     **wb_kwargs))
        in_specs.append(pl.BlockSpec((1, n_pad), lambda i: (0, 0), **wb_kwargs))
        out_spec = pl.BlockSpec((tile_b, n_pad), lambda i: (i, 0))
        return pl.pallas_call(
            kernel,
            out_shape=jax.ShapeDtypeStruct((padded_batch, n_pad), out_dtype),
            grid=(num_tiles,),
            in_specs=in_specs,
            out_specs=out_spec,
            compiler_params=pltpu.CompilerParams(
                dimension_semantics=("parallel",),
                vmem_limit_bytes=_VMEM_LIMIT_BYTES),
            cost_estimate=cost,
        )

    try:
        out_pad = jax.block_until_ready(_build(1)(*client_xs, w_prep, b_prep))
    except Exception:
        # Fallback for Pallas builds that reject single buffering.
        out_pad = _build(None)(*client_xs, w_prep, b_prep)

    if return_padded:
        return out_pad
    # Single cheap slice restores module semantics [batch, num_classes].
    return out_pad[:batch, :num_classes]


if __name__ == "__main__":
    key = jax.random.PRNGKey(0)
    kx, kw, kb, kw2, kb2, kw3, kb3 = jax.random.split(key, 7)

    num_clients = 3
    num_classes = 16

    def make_xs(batch, cut_dim):
        return [jax.random.normal(jax.random.fold_in(kx, 1000 * cut_dim + i),
                                  (batch, cut_dim), jnp.float32)
                for i in range(num_clients)]

    # ---- 'mean' (module default): batch=8, cut_dim=32 ----
    batch, cut_dim = 8, 32
    xs = make_xs(batch, cut_dim)
    bound = 1.0 / (cut_dim ** 0.5)
    weight = jax.random.uniform(kw, (num_classes, cut_dim), jnp.float32,
                                -bound, bound)
    bias = jax.random.uniform(kb, (num_classes,), jnp.float32, -bound, bound)

    w_p, b_p = prepare_fusion_params(weight, bias, "mean", num_clients, cut_dim)
    out = jax.block_until_ready(fusion_forward(xs, w_p, b_p, num_classes, "mean"))
    ref = jnp.mean(jnp.stack(xs), axis=0) @ weight.T + bias
    assert out.shape == (batch, num_classes)
    assert jnp.allclose(out, ref, atol=1e-5, rtol=1e-5)

    # ---- 'sum' ----
    w_ps, b_ps = prepare_fusion_params(weight, bias, "sum", num_clients, cut_dim)
    out_s = jax.block_until_ready(fusion_forward(xs, w_ps, b_ps, num_classes, "sum"))
    ref_s = jnp.sum(jnp.stack(xs), axis=0) @ weight.T + bias
    assert jnp.allclose(out_s, ref_s, atol=1e-4, rtol=1e-5)

    # ---- 'conc', cut_dim=32 (misaligned -> per-client-dot path) ----
    conc_in = num_clients * cut_dim
    bc = 1.0 / (conc_in ** 0.5)
    weight_c = jax.random.uniform(kw2, (num_classes, conc_in), jnp.float32, -bc, bc)
    bias_c = jax.random.uniform(kb2, (num_classes,), jnp.float32, -bc, bc)
    w_pc, b_pc = prepare_fusion_params(weight_c, bias_c, "conc",
                                       num_clients, cut_dim)
    out_c = jax.block_until_ready(fusion_forward(xs, w_pc, b_pc, num_classes, "conc"))
    ref_c = jnp.concatenate(xs, axis=1) @ weight_c.T + bias_c
    assert jnp.allclose(out_c, ref_c, atol=1e-4, rtol=1e-5)

    # ---- 'conc', cut_dim=128 (lane-aligned -> fused single-dot path) ----
    cut_dim2 = 128
    xs2 = make_xs(batch, cut_dim2)
    conc_in2 = num_clients * cut_dim2
    bc2 = 1.0 / (conc_in2 ** 0.5)
    weight_c2 = jax.random.uniform(kw3, (num_classes, conc_in2), jnp.float32,
                                   -bc2, bc2)
    bias_c2 = jax.random.uniform(kb3, (num_classes,), jnp.float32, -bc2, bc2)
    w_pc2, b_pc2 = prepare_fusion_params(weight_c2, bias_c2, "conc",
                                         num_clients, cut_dim2)
    out_c2 = jax.block_until_ready(
        fusion_forward(xs2, w_pc2, b_pc2, num_classes, "conc"))
    ref_c2 = jnp.concatenate(xs2, axis=1) @ weight_c2.T + bias_c2
    assert jnp.allclose(out_c2, ref_c2, atol=1e-4, rtol=1e-5)

    # ---- 'mean', ragged batch=40 (exercises batch padding + 2-step grid) ----
    batch3 = 40
    xs3 = make_xs(batch3, cut_dim)
    out_m3 = jax.block_until_ready(
        fusion_forward(xs3, w_p, b_p, num_classes, "mean"))
    ref_m3 = jnp.mean(jnp.stack(xs3), axis=0) @ weight.T + bias
    assert out_m3.shape == (batch3, num_classes)
    assert jnp.allclose(out_m3, ref_m3, atol=1e-5, rtol=1e-5)

    # ---- 'mean' with bf16-stored weight (HBM-bound: halve weight bytes) ----
    w_pb, b_pb = prepare_fusion_params(weight, bias, "mean", num_clients,
                                       cut_dim, param_dtype=jnp.bfloat16)
    out_b = jax.block_until_ready(
        fusion_forward(xs, w_pb, b_pb, num_classes, "mean"))
    assert jnp.allclose(out_b, ref, atol=5e-2, rtol=5e-2)

    print("KERNEL_OK")
</pallas_src>

<mosaic_0001>
module attributes {stable_mosaic.version = 11 : i64} {
  func.func @_fusion_kernel(%arg0: i32, %arg1: memref<8x32xf32, #tpu.memory_space<vmem>>, %arg2: memref<8x32xf32, #tpu.memory_space<vmem>>, %arg3: memref<8x32xf32, #tpu.memory_space<vmem>>, %arg4: memref<1x32x128xf32, #tpu.memory_space<vmem>>, %arg5: memref<1x128xf32, #tpu.memory_space<vmem>>, %arg6: memref<8x128xf32, #tpu.memory_space<vmem>>) attributes {dimension_semantics = [#tpu.dimension_semantics<parallel>], iteration_bounds = array<i64: 1>, scalar_prefetch = 0 : i64, scratch_operands = 0 : i64, tpu.core_type = #tpu.core_type<tc>, window_params = [{transform_indices = @transform_0, window_bounds = array<i64: 8, 32>}, {transform_indices = @transform_1, window_bounds = array<i64: 8, 32>}, {transform_indices = @transform_2, window_bounds = array<i64: 8, 32>}, {pipeline_mode = #tpu.pipeline_mode<synchronous>, transform_indices = @transform_3, window_bounds = array<i64: 1, 32, 128>}, {pipeline_mode = #tpu.pipeline_mode<synchronous>, transform_indices = @transform_4, window_bounds = array<i64: 1, 128>}, {transform_indices = @transform_5, window_bounds = array<i64: 8, 128>}]} {
    %c0 = arith.constant 0 : index
    %c0_0 = arith.constant 0 : index
    %0 = vector.load %arg1[%c0, %c0_0] : memref<8x32xf32, #tpu.memory_space<vmem>>, vector<8x32xf32>
    %c0_1 = arith.constant 0 : index
    %c0_2 = arith.constant 0 : index
    %1 = vector.load %arg2[%c0_1, %c0_2] : memref<8x32xf32, #tpu.memory_space<vmem>>, vector<8x32xf32>
    %2 = arith.addf %0, %1 : vector<8x32xf32>
    %c0_3 = arith.constant 0 : index
    %c0_4 = arith.constant 0 : index
    %3 = vector.load %arg3[%c0_3, %c0_4] : memref<8x32xf32, #tpu.memory_space<vmem>>, vector<8x32xf32>
    %4 = arith.addf %2, %3 : vector<8x32xf32>
    %c0_5 = arith.constant 0 : index
    %c0_6 = arith.constant 0 : index
    %c0_7 = arith.constant 0 : index
    %5 = vector.load %arg4[%c0_5, %c0_6, %c0_7] : memref<1x32x128xf32, #tpu.memory_space<vmem>>, vector<1x32x128xf32>
    %6 = vector.shape_cast %5 : vector<1x32x128xf32> to vector<32x128xf32>
    %cst = arith.constant dense<0.000000e+00> : vector<8x128xf32>
    %7 = tpu.matmul %4, %6, %cst {dimension_numbers = #tpu.dot_dimension_numbers<[1], [0], [0], [1], [0, 0, 1, 1], [], []>} : vector<8x32xf32>, vector<32x128xf32>, vector<8x128xf32> -> vector<8x128xf32>
    %c0_8 = arith.constant 0 : index
    %c0_9 = arith.constant 0 : index
    %8 = vector.load %arg5[%c0_8, %c0_9] : memref<1x128xf32, #tpu.memory_space<vmem>>, vector<1x128xf32>
    %9 = vector.broadcast %8 : vector<1x128xf32> to vector<8x128xf32>
    %10 = arith.addf %7, %9 : vector<8x128xf32>
    %c0_10 = arith.constant 0 : index
    %c0_11 = arith.constant 0 : index
    %11 = vector.load %arg6[%c0_10, %c0_11] : memref<8x128xf32, #tpu.memory_space<vmem>>, vector<8x128xf32>
    tpu.vector_store %arg6[%c0_10, %c0_11], %10 {strides = array<i32>} : memref<8x128xf32, #tpu.memory_space<vmem>>, vector<8x128xf32>,
    return
  }
  func.func @transform_0(%arg0: i32) -> (i32, i32) {
    %c0_i32 = arith.constant 0 : i32
    %c0_i32_0 = arith.constant 0 : i32
    return %arg0, %c0_i32 : i32, i32
  }
  func.func @transform_1(%arg0: i32) -> (i32, i32) {
    %c0_i32 = arith.constant 0 : i32
    %c0_i32_0 = arith.constant 0 : i32
    return %arg0, %c0_i32 : i32, i32
  }
  func.func @transform_2(%arg0: i32) -> (i32, i32) {
    %c0_i32 = arith.constant 0 : i32
    %c0_i32_0 = arith.constant 0 : i32
    return %arg0, %c0_i32 : i32, i32
  }
  func.func @transform_3(%arg0: i32) -> (i32, i32, i32) {
    %c0_i32 = arith.constant 0 : i32
    %c0_i32_0 = arith.constant 0 : i32
    %c0_i32_1 = arith.constant 0 : i32
    %c0_i32_2 = arith.constant 0 : i32
    return %c0_i32, %c0_i32_0, %c0_i32_1 : i32, i32, i32
  }
  func.func @transform_4(%arg0: i32) -> (i32, i32) {
    %c0_i32 = arith.constant 0 : i32
    %c0_i32_0 = arith.constant 0 : i32
    %c0_i32_1 = arith.constant 0 : i32
    return %c0_i32, %c0_i32_0 : i32, i32
  }
  func.func @transform_5(%arg0: i32) -> (i32, i32) {
    %c0_i32 = arith.constant 0 : i32
    %c0_i32_0 = arith.constant 0 : i32
    return %arg0, %c0_i32 : i32, i32
  }
}

module attributes {stable_mosaic.version = 11 : i64} {
  func.func @_fusion_kernel(%arg0: i32, %arg1: memref<8x32xf32, #tpu.memory_space<vmem>>, %arg2: memref<8x32xf32, #tpu.memory_space<vmem>>, %arg3: memref<8x32xf32, #tpu.memory_space<vmem>>, %arg4: memref<1x32x128xf32, #tpu.memory_space<vmem>>, %arg5: memref<1x128xf32, #tpu.memory_space<vmem>>, %arg6: memref<8x128xf32, #tpu.memory_space<vmem>>) attributes {dimension_semantics = [#tpu.dimension_semantics<parallel>], iteration_bounds = array<i64: 1>, scalar_prefetch = 0 : i64, scratch_operands = 0 : i64, tpu.core_type = #tpu.core_type<tc>, window_params = [{transform_indices = @transform_0, window_bounds = array<i64: 8, 32>}, {transform_indices = @transform_1, window_bounds = array<i64: 8, 32>}, {transform_indices = @transform_2, window_bounds = array<i64: 8, 32>}, {pipeline_mode = #tpu.pipeline_mode<synchronous>, transform_indices = @transform_3, window_bounds = array<i64: 1, 32, 128>}, {pipeline_mode = #tpu.pipeline_mode<synchronous>, transform_indices = @transform_4, window_bounds = array<i64: 1, 128>}, {transform_indices = @transform_5, window_bounds = array<i64: 8, 128>}]} {
    %c0 = arith.constant 0 : index
    %c0_0 = arith.constant 0 : index
    %0 = vector.load %arg1[%c0, %c0_0] : memref<8x32xf32, #tpu.memory_space<vmem>>, vector<8x32xf32>
    %c0_1 = arith.constant 0 : index
    %c0_2 = arith.constant 0 : index
    %1 = vector.load %arg2[%c0_1, %c0_2] : memref<8x32xf32, #tpu.memory_space<vmem>>, vector<8x32xf32>
    %2 = arith.addf %0, %1 : vector<8x32xf32>
    %c0_3 = arith.constant 0 : index
    %c0_4 = arith.constant 0 : index
    %3 = vector.load %arg3[%c0_3, %c0_4] : memref<8x32xf32, #tpu.memory_space<vmem>>, vector<8x32xf32>
    %4 = arith.addf %2, %3 : vector<8x32xf32>
    %c0_5 = arith.constant 0 : index
    %c0_6 = arith.constant 0 : index
    %c0_7 = arith.constant 0 : index
    %5 = vector.load %arg4[%c0_5, %c0_6, %c0_7] : memref<1x32x128xf32, #tpu.memory_space<vmem>>, vector<1x32x128xf32>
    %6 = vector.shape_cast %5 : vector<1x32x128xf32> to vector<32x128xf32>
    %cst = arith.constant dense<0.000000e+00> : vector<8x128xf32>
    %7 = tpu.matmul %4, %6, %cst {dimension_numbers = #tpu.dot_dimension_numbers<[1], [0], [0], [1], [0, 0, 1, 1], [], []>} : vector<8x32xf32>, vector<32x128xf32>, vector<8x128xf32> -> vector<8x128xf32>
    %c0_8 = arith.constant 0 : index
    %c0_9 = arith.constant 0 : index
    %8 = vector.load %arg5[%c0_8, %c0_9] : memref<1x128xf32, #tpu.memory_space<vmem>>, vector<1x128xf32>
    %9 = vector.broadcast %8 : vector<1x128xf32> to vector<8x128xf32>
    %10 = arith.addf %7, %9 : vector<8x128xf32>
    %c0_10 = arith.constant 0 : index
    %c0_11 = arith.constant 0 : index
    %11 = vector.load %arg6[%c0_10, %c0_11] : memref<8x128xf32, #tpu.memory_space<vmem>>, vector<8x128xf32>
    tpu.vector_store %arg6[%c0_10, %c0_11], %10 {strides = array<i32>} : memref<8x128xf32, #tpu.memory_space<vmem>>, vector<8x128xf32>,
    return
  }
  func.func @transform_0(%arg0: i32) -> (i32, i32) {
    %c0_i32 = arith.constant 0 : i32
    %c0_i32_0 = arith.constant 0 : i32
    return %arg0, %c0_i32 : i32, i32
  }
  func.func @transform_1(%arg0: i32) -> (i32, i32) {
    %c0_i32 = arith.constant 0 : i32
    %c0_i32_0 = arith.constant 0 : i32
    return %arg0, %c0_i32 : i32, i32
  }
  func.func @transform_2(%arg0: i32) -> (i32, i32) {
    %c0_i32 = arith.constant 0 : i32
    %c0_i32_0 = arith.constant 0 : i32
    return %arg0, %c0_i32 : i32, i32
  }
  func.func @transform_3(%arg0: i32) -> (i32, i32, i32) {
    %c0_i32 = arith.constant 0 : i32
    %c0_i32_0 = arith.constant 0 : i32
    %c0_i32_1 = arith.constant 0 : i32
    %c0_i32_2 = arith.constant 0 : i32
    return %c0_i32, %c0_i32_0, %c0_i32_1 : i32, i32, i32
  }
  func.func @transform_4(%arg0: i32) -> (i32, i32) {
    %c0_i32 = arith.constant 0 : i32
    %c0_i32_0 = arith.constant 0 : i32
    %c0_i32_1 = arith.constant 0 : i32
    return %c0_i32, %c0_i32_0 : i32, i32
  }
  func.func @transform_5(%arg0: i32) -> (i32, i32) {
    %c0_i32 = arith.constant 0 : i32
    %c0_i32_0 = arith.constant 0 : i32
    return %arg0, %c0_i32 : i32, i32
  }
}

</mosaic_0001>

<llo_original>
// kernel: tpu_custom_call.1
$region0: #{tpu_custom_call.1}
  #allocation0 [shape = 'u32[]', space=smem, size = 0x4, offset = 0x4, fixed_abs, tag = 'smem constant byte address 0x4 - core index']
  #allocation1 [shape = 'u32[72,128]{1,0:T(1,128)}', space=vmem, size = 0x9000, scoped, tag = 'internal scratch']
  %s0 = inlined_call_operand.hbm [shape: f32[8,32], index: 0, kind: input, shape index: {}]
  %s1 = inlined_call_operand.hbm [shape: f32[8,32], index: 1, kind: input, shape index: {}]
  %s2 = inlined_call_operand.hbm [shape: f32[8,32], index: 2, kind: input, shape index: {}]
  %s3 = inlined_call_operand.hbm [shape: f32[1,32,128], index: 3, kind: input, shape index: {}]
  %s4 = inlined_call_operand.vmem [shape: f32[1,128], index: 4, kind: input, shape index: {}]
  %s5 = inlined_call_operand.hbm [shape: f32[8,128], index: 5, kind: output, shape index: {}]
  %s6 = sld [smem:[#allocation0]]
  $region46: #{tpu_custom_call.1} parent=0
    _
  %s8 = ssub.s32 1, %s6
  %s9 = scalar_select 0, %s8, %s6
  $region1: #{tpu_custom_call.1} parent=0
    #allocation2 [shape = 'u8[4096]{0}', space=vmem, size = 0x1000, scoped, tag = 'input window, operand 0, single buffered']
    #allocation3 [shape = 's32[1]{0}', space=sflag, size = 0x4, scoped, tag = 'scoped memory for tpu_custom_call.1']
    #allocation4 [shape = 's32[1]{0}', space=sflag, size = 0x4, scoped, tag = 'scoped memory for tpu_custom_call.1']
    #allocation5 [shape = 'u8[4096]{0}', space=vmem, size = 0x1000, scoped, tag = 'input window, operand 1, single buffered']
    #allocation6 [shape = 's32[1]{0}', space=sflag, size = 0x4, scoped, tag = 'scoped memory for tpu_custom_call.1']
    #allocation7 [shape = 'u8[4096]{0}', space=vmem, size = 0x1000, scoped, tag = 'input window, operand 2, single buffered']
    #allocation8 [shape = 'u8[16384]{0}', space=vmem, size = 0x4000, scoped, tag = 'input window, operand 3, single buffered']
    #allocation9 [shape = 's32[1]{0}', space=sflag, size = 0x4, scoped, tag = 'scoped memory for tpu_custom_call.1']
    #allocation10 [shape = 'u8[4096]{0}', space=vmem, size = 0x1000, scoped, tag = 'output window, operand 0, single buffered']
    %10 = vsyncpa [#allocation3], 0
    %11 = vsyncpa [#allocation6], 0
    %12 = vsyncpa [#allocation9], 0
    %13 = vsyncpa [#allocation4], 0
    // Predicated region
    $region2: #{tpu_custom_call.1} parent=1 // pred_check
      _
    $region3: #{tpu_custom_call.1} parent=1 // pred_check_branch
      %15 = sbr.rel (0) target = $region5
    $region4: #{tpu_custom_call.1} parent=1 // pred_region
      %17 = vsyncadd [#allocation3], 0
      %s19 = sshll.u32 %s0, 4
      %s20 = int_to_ptr.hbm [resolvable:$true] %s19
      %s21 = sshll.u32 [#allocation2], 4
      %s22 = int_to_ptr.vmem [resolvable:$true] %s21
      %24 = dma.hbm_to_vmem [thread:$0]  %s20, 128, %s22, [#allocation3]
    $region5: #{tpu_custom_call.1} parent=1 // pred_fallthru
      _
    // Predicated region
    $region6: #{tpu_custom_call.1} parent=1 // pred_check
      _
    $region7: #{tpu_custom_call.1} parent=1 // pred_check_branch
      %26 = sbr.rel (0) target = $region9
    $region8: #{tpu_custom_call.1} parent=1 // pred_region
      %28 = vsyncadd [#allocation6], 0
      %s30 = sshll.u32 %s1, 4
      %s31 = int_to_ptr.hbm [resolvable:$true] %s30
      %s32 = sshll.u32 [#allocation5], 4
      %s33 = int_to_ptr.vmem [resolvable:$true] %s32
      %35 = dma.hbm_to_vmem [thread:$0]  %s31, 128, %s33, [#allocation6]
    $region9: #{tpu_custom_call.1} parent=1 // pred_fallthru
      _
    // Predicated region
    $region10: #{tpu_custom_call.1} parent=1 // pred_check
      _
    $region11: #{tpu_custom_call.1} parent=1 // pred_check_branch
      %37 = sbr.rel (0) target = $region13
    $region12: #{tpu_custom_call.1} parent=1 // pred_region
      %39 = vsyncadd [#allocation6], 0
      %s41 = sshll.u32 %s2, 4
      %s42 = int_to_ptr.hbm [resolvable:$true] %s41
      %s43 = sshll.u32 [#allocation7], 4
      %s44 = int_to_ptr.vmem [resolvable:$true] %s43
      %46 = dma.hbm_to_vmem [thread:$0]  %s42, 128, %s44, [#allocation6]
    $region13: #{tpu_custom_call.1} parent=1 // pred_fallthru
      _
    // Predicated region
    $region14: #{tpu_custom_call.1} parent=1 // pred_check
      _
    $region15: #{tpu_custom_call.1} parent=1 // pred_check_branch
      %48 = sbr.rel (0) target = $region17
    $region16: #{tpu_custom_call.1} parent=1 // pred_region
      %50 = vsyncadd [#allocation9], 0
      %s51 = sshll.u32 %s3, 4
      %s52 = int_to_ptr.hbm [resolvable:$true] %s51
      %s53 = sshll.u32 [#allocation8], 4
      %s54 = int_to_ptr.vmem [resolvable:$true] %s53
      %59 = dma.hbm_to_vmem [thread:$0]  %s52, 512, %s54, [#allocation9], 128, 128, 8
    $region17: #{tpu_custom_call.1} parent=1 // pred_fallthru
      _
    // Predicated region
    $region18: #{tpu_custom_call.1} parent=1 // pred_check
      _
    $region19: #{tpu_custom_call.1} parent=1 // pred_check_branch
      %61 = sbr.rel (0) target = $region21
    $region20: #{tpu_custom_call.1} parent=1 // pred_region
      _
    $region21: #{tpu_custom_call.1} parent=1 // pred_fallthru
      _
    // Predicated region
    $region22: #{tpu_custom_call.1} parent=1 // pred_check
      _
    $region23: #{tpu_custom_call.1} parent=1 // pred_check_branch
      %63 = sbr.rel (0) target = $region25
    $region24: #{tpu_custom_call.1} parent=1 // pred_region
      %65 = dma.done [#allocation3], 128
    $region25: #{tpu_custom_call.1} parent=1 // pred_fallthru
      _
    // Predicated region
    $region26: #{tpu_custom_call.1} parent=1 // pred_check
      _
    $region27: #{tpu_custom_call.1} parent=1 // pred_check_branch
      %67 = sbr.rel (0) target = $region29
    $region28: #{tpu_custom_call.1} parent=1 // pred_region
      %69 = dma.done [#allocation6], 128
    $region29: #{tpu_custom_call.1} parent=1 // pred_fallthru
      _
    // Predicated region
    $region30: #{tpu_custom_call.1} parent=1 // pred_check
      _
    $region31: #{tpu_custom_call.1} parent=1 // pred_check_branch
      %71 = sbr.rel (0) target = $region33
    $region32: #{tpu_custom_call.1} parent=1 // pred_region
      %73 = dma.done [#allocation6], 128
    $region33: #{tpu_custom_call.1} parent=1 // pred_fallthru
      _
    // Predicated region
    $region34: #{tpu_custom_call.1} parent=1 // pred_check
      _
    $region35: #{tpu_custom_call.1} parent=1 // pred_check_branch
      %75 = sbr.rel (0) target = $region37
    $region36: #{tpu_custom_call.1} parent=1 // pred_region
      %77 = dma.done [#allocation9], 512
    $region37: #{tpu_custom_call.1} parent=1 // pred_fallthru
      _
    %v78 = vld [vmem:[#allocation2] sm:$0xff]
    %v79 = vld [vmem:[#allocation5] sm:$0xff]
    %v80 = vadd.f32 %v78, %v79
    %v81 = vld [vmem:[#allocation7] sm:$0xff]
    %v82 = vadd.f32 %v80, %v81
    %v83 = vld [vmem:[#allocation8] sm:$0xff]
    %v84 = vld [vmem:[#allocation8 + $0x8] sm:$0xff]
    %v85 = vld [vmem:[#allocation8 + $0x10] sm:$0xff]
    %v86 = vld [vmem:[#allocation8 + $0x18] sm:$0xff]
    %v87 = vld [vmem:[%s4] sm:$0x1]
    %v89 = vperm.slane %v87, 0
    %vm91 = vcmask 261120
    %v93 = vsel %vm91, %v82, 0
    %95 = vmatpush.msra.mxu0 0.0
    %96 = vmatpush.msra.mxu0 0.0
    %97 = vmatpush.msra.mxu0 0.0
    %98 = vmatpush.msra.mxu0 0.0
    %99 = vmatpush.msra.mxu0 0.0
    %100 = vmatpush.msra.mxu0 0.0
    %101 = vmatpush.msra.mxu0 0.0
    %102 = vmatpush.msra.mxu0 0.0
    %103 = vmatpush.msra.mxu0 0.0
    %104 = vmatpush.msra.mxu0 0.0
    %105 = vmatpush.msra.mxu0 0.0
    %106 = vmatpush.msra.mxu0 0.0
    %107 = vmatpush.msra.mxu0 %v86
    %108 = vmatpush.msra.mxu0 %v85
    %109 = vmatpush.msra.mxu0 %v84
    %110 = vmatpush.msra.mxu0 %v83
    %111 = vmatmul.f32.gmra.mxu0 %v93
    %v112 = vpop.f32.mrf.mxu0
    %v113 = vadd.f32 %v89, %v112
    %114 = vdwg.mxu0
    %115 = vst [vmem:[#allocation10] sm:$0xff] %v113
    // Predicated region
    $region38: #{tpu_custom_call.1} parent=1 // pred_check
      _
    $region39: #{tpu_custom_call.1} parent=1 // pred_check_branch
      %117 = sbr.rel (0) target = $region41
    $region40: #{tpu_custom_call.1} parent=1 // pred_region
      %119 = vsyncadd [#allocation4], 0
      %s121 = sshll.u32 [#allocation10], 4
      %s122 = int_to_ptr.vmem [resolvable:$true] %s121
      %s123 = sshll.u32 %s5, 4
      %s124 = int_to_ptr.hbm [resolvable:$true] %s123
      %126 = dma.vmem_to_hbm [thread:$0]  %s122, 128, %s124, [#allocation4]
    $region41: #{tpu_custom_call.1} parent=1 // pred_fallthru
      _
    // Predicated region
    $region42: #{tpu_custom_call.1} parent=1 // pred_check
      _
    $region43: #{tpu_custom_call.1} parent=1 // pred_check_branch
      %128 = sbr.rel (0) target = $region45
    $region44: #{tpu_custom_call.1} parent=1 // pred_region
      %130 = dma.done [#allocation4], 128
    $region45: #{tpu_custom_call.1} parent=1 // pred_fallthru
      _
    %131 = vsyncpa [#allocation3], 1
    %132 = vsyncpa [#allocation6], 1
    %133 = vsyncpa [#allocation9], 1
    %134 = vsyncpa [#allocation4], 1

// kernel: tpu_custom_call.1
$region0: #{tpu_custom_call.1}
  #allocation0 [shape = 'u32[]', space=smem, size = 0x4, offset = 0x4, fixed_abs, tag = 'smem constant byte address 0x4 - core index']
  #allocation1 [shape = 'u32[72,128]{1,0:T(1,128)}', space=vmem, size = 0x9000, scoped, tag = 'internal scratch']
  %s0 = inlined_call_operand.hbm [shape: f32[8,32], index: 0, kind: input, shape index: {}]
  %s1 = inlined_call_operand.hbm [shape: f32[8,32], index: 1, kind: input, shape index: {}]
  %s2 = inlined_call_operand.hbm [shape: f32[8,32], index: 2, kind: input, shape index: {}]
  %s3 = inlined_call_operand.hbm [shape: f32[1,32,128], index: 3, kind: input, shape index: {}]
  %s4 = inlined_call_operand.vmem [shape: f32[1,128], index: 4, kind: input, shape index: {}]
  %s5 = inlined_call_operand.hbm [shape: f32[8,128], index: 5, kind: output, shape index: {}]
  %s6 = sld [smem:[#allocation0]]
  $region46: #{tpu_custom_call.1} parent=0
    _
  %s8 = ssub.s32 1, %s6
  %s9 = scalar_select 0, %s8, %s6
  $region1: #{tpu_custom_call.1} parent=0
    #allocation2 [shape = 'u8[4096]{0}', space=vmem, size = 0x1000, scoped, tag = 'input window, operand 0, single buffered']
    #allocation3 [shape = 's32[1]{0}', space=sflag, size = 0x4, scoped, tag = 'scoped memory for tpu_custom_call.1']
    #allocation4 [shape = 's32[1]{0}', space=sflag, size = 0x4, scoped, tag = 'scoped memory for tpu_custom_call.1']
    #allocation5 [shape = 'u8[4096]{0}', space=vmem, size = 0x1000, scoped, tag = 'input window, operand 1, single buffered']
    #allocation6 [shape = 's32[1]{0}', space=sflag, size = 0x4, scoped, tag = 'scoped memory for tpu_custom_call.1']
    #allocation7 [shape = 'u8[4096]{0}', space=vmem, size = 0x1000, scoped, tag = 'input window, operand 2, single buffered']
    #allocation8 [shape = 'u8[16384]{0}', space=vmem, size = 0x4000, scoped, tag = 'input window, operand 3, single buffered']
    #allocation9 [shape = 's32[1]{0}', space=sflag, size = 0x4, scoped, tag = 'scoped memory for tpu_custom_call.1']
    #allocation10 [shape = 'u8[4096]{0}', space=vmem, size = 0x1000, scoped, tag = 'output window, operand 0, single buffered']
    %10 = vsyncpa [#allocation3], 0
    %11 = vsyncpa [#allocation6], 0
    %12 = vsyncpa [#allocation9], 0
    %13 = vsyncpa [#allocation4], 0
    // Predicated region
    $region2: #{tpu_custom_call.1} parent=1 // pred_check
      _
    $region3: #{tpu_custom_call.1} parent=1 // pred_check_branch
      %15 = sbr.rel (0) target = $region5
    $region4: #{tpu_custom_call.1} parent=1 // pred_region
      %17 = vsyncadd [#allocation3], 0
      %s19 = sshll.u32 %s0, 4
      %s20 = int_to_ptr.hbm [resolvable:$true] %s19
      %s21 = sshll.u32 [#allocation2], 4
      %s22 = int_to_ptr.vmem [resolvable:$true] %s21
      %24 = dma.hbm_to_vmem [thread:$0]  %s20, 128, %s22, [#allocation3]
    $region5: #{tpu_custom_call.1} parent=1 // pred_fallthru
      _
    // Predicated region
    $region6: #{tpu_custom_call.1} parent=1 // pred_check
      _
    $region7: #{tpu_custom_call.1} parent=1 // pred_check_branch
      %26 = sbr.rel (0) target = $region9
    $region8: #{tpu_custom_call.1} parent=1 // pred_region
      %28 = vsyncadd [#allocation6], 0
      %s30 = sshll.u32 %s1, 4
      %s31 = int_to_ptr.hbm [resolvable:$true] %s30
      %s32 = sshll.u32 [#allocation5], 4
      %s33 = int_to_ptr.vmem [resolvable:$true] %s32
      %35 = dma.hbm_to_vmem [thread:$0]  %s31, 128, %s33, [#allocation6]
    $region9: #{tpu_custom_call.1} parent=1 // pred_fallthru
      _
    // Predicated region
    $region10: #{tpu_custom_call.1} parent=1 // pred_check
      _
    $region11: #{tpu_custom_call.1} parent=1 // pred_check_branch
      %37 = sbr.rel (0) target = $region13
    $region12: #{tpu_custom_call.1} parent=1 // pred_region
      %39 = vsyncadd [#allocation6], 0
      %s41 = sshll.u32 %s2, 4
      %s42 = int_to_ptr.hbm [resolvable:$true] %s41
      %s43 = sshll.u32 [#allocation7], 4
      %s44 = int_to_ptr.vmem [resolvable:$true] %s43
      %46 = dma.hbm_to_vmem [thread:$0]  %s42, 128, %s44, [#allocation6]
    $region13: #{tpu_custom_call.1} parent=1 // pred_fallthru
      _
    // Predicated region
    $region14: #{tpu_custom_call.1} parent=1 // pred_check
      _
    $region15: #{tpu_custom_call.1} parent=1 // pred_check_branch
      %48 = sbr.rel (0) target = $region17
    $region16: #{tpu_custom_call.1} parent=1 // pred_region
      %50 = vsyncadd [#allocation9], 0
      %s51 = sshll.u32 %s3, 4
      %s52 = int_to_ptr.hbm [resolvable:$true] %s51
      %s53 = sshll.u32 [#allocation8], 4
      %s54 = int_to_ptr.vmem [resolvable:$true] %s53
      %59 = dma.hbm_to_vmem [thread:$0]  %s52, 512, %s54, [#allocation9], 128, 128, 8
    $region17: #{tpu_custom_call.1} parent=1 // pred_fallthru
      _
    // Predicated region
    $region18: #{tpu_custom_call.1} parent=1 // pred_check
      _
    $region19: #{tpu_custom_call.1} parent=1 // pred_check_branch
      %61 = sbr.rel (0) target = $region21
    $region20: #{tpu_custom_call.1} parent=1 // pred_region
      _
    $region21: #{tpu_custom_call.1} parent=1 // pred_fallthru
      _
    // Predicated region
    $region22: #{tpu_custom_call.1} parent=1 // pred_check
      _
    $region23: #{tpu_custom_call.1} parent=1 // pred_check_branch
      %63 = sbr.rel (0) target = $region25
    $region24: #{tpu_custom_call.1} parent=1 // pred_region
      %65 = dma.done [#allocation3], 128
    $region25: #{tpu_custom_call.1} parent=1 // pred_fallthru
      _
    // Predicated region
    $region26: #{tpu_custom_call.1} parent=1 // pred_check
      _
    $region27: #{tpu_custom_call.1} parent=1 // pred_check_branch
      %67 = sbr.rel (0) target = $region29
    $region28: #{tpu_custom_call.1} parent=1 // pred_region
      %69 = dma.done [#allocation6], 128
    $region29: #{tpu_custom_call.1} parent=1 // pred_fallthru
      _
    // Predicated region
    $region30: #{tpu_custom_call.1} parent=1 // pred_check
      _
    $region31: #{tpu_custom_call.1} parent=1 // pred_check_branch
      %71 = sbr.rel (0) target = $region33
    $region32: #{tpu_custom_call.1} parent=1 // pred_region
      %73 = dma.done [#allocation6], 128
    $region33: #{tpu_custom_call.1} parent=1 // pred_fallthru
      _
    // Predicated region
    $region34: #{tpu_custom_call.1} parent=1 // pred_check
      _
    $region35: #{tpu_custom_call.1} parent=1 // pred_check_branch
      %75 = sbr.rel (0) target = $region37
    $region36: #{tpu_custom_call.1} parent=1 // pred_region
      %77 = dma.done [#allocation9], 512
    $region37: #{tpu_custom_call.1} parent=1 // pred_fallthru
      _
    %v78 = vld [vmem:[#allocation2] sm:$0xff]
    %v79 = vld [vmem:[#allocation5] sm:$0xff]
    %v80 = vadd.f32 %v78, %v79
    %v81 = vld [vmem:[#allocation7] sm:$0xff]
    %v82 = vadd.f32 %v80, %v81
    %v83 = vld [vmem:[#allocation8] sm:$0xff]
    %v84 = vld [vmem:[#allocation8 + $0x8] sm:$0xff]
    %v85 = vld [vmem:[#allocation8 + $0x10] sm:$0xff]
    %v86 = vld [vmem:[#allocation8 + $0x18] sm:$0xff]
    %v87 = vld [vmem:[%s4] sm:$0x1]
    %v89 = vperm.slane %v87, 0
    %vm91 = vcmask 261120
    %v93 = vsel %vm91, %v82, 0
    %95 = vmatpush.msra.mxu0 0.0
    %96 = vmatpush.msra.mxu0 0.0
    %97 = vmatpush.msra.mxu0 0.0
    %98 = vmatpush.msra.mxu0 0.0
    %99 = vmatpush.msra.mxu0 0.0
    %100 = vmatpush.msra.mxu0 0.0
    %101 = vmatpush.msra.mxu0 0.0
    %102 = vmatpush.msra.mxu0 0.0
    %103 = vmatpush.msra.mxu0 0.0
    %104 = vmatpush.msra.mxu0 0.0
    %105 = vmatpush.msra.mxu0 0.0
    %106 = vmatpush.msra.mxu0 0.0
    %107 = vmatpush.msra.mxu0 %v86
    %108 = vmatpush.msra.mxu0 %v85
    %109 = vmatpush.msra.mxu0 %v84
    %110 = vmatpush.msra.mxu0 %v83
    %111 = vmatmul.f32.gmra.mxu0 %v93
    %v112 = vpop.f32.mrf.mxu0
    %v113 = vadd.f32 %v89, %v112
    %114 = vdwg.mxu0
    %115 = vst [vmem:[#allocation10] sm:$0xff] %v113
    // Predicated region
    $region38: #{tpu_custom_call.1} parent=1 // pred_check
      _
    $region39: #{tpu_custom_call.1} parent=1 // pred_check_branch
      %117 = sbr.rel (0) target = $region41
    $region40: #{tpu_custom_call.1} parent=1 // pred_region
      %119 = vsyncadd [#allocation4], 0
      %s121 = sshll.u32 [#allocation10], 4
      %s122 = int_to_ptr.vmem [resolvable:$true] %s121
      %s123 = sshll.u32 %s5, 4
      %s124 = int_to_ptr.hbm [resolvable:$true] %s123
      %126 = dma.vmem_to_hbm [thread:$0]  %s122, 128, %s124, [#allocation4]
    $region41: #{tpu_custom_call.1} parent=1 // pred_fallthru
      _
    // Predicated region
    $region42: #{tpu_custom_call.1} parent=1 // pred_check
      _
    $region43: #{tpu_custom_call.1} parent=1 // pred_check_branch
      %128 = sbr.rel (0) target = $region45
    $region44: #{tpu_custom_call.1} parent=1 // pred_region
      %130 = dma.done [#allocation4], 128
    $region45: #{tpu_custom_call.1} parent=1 // pred_fallthru
      _
    %131 = vsyncpa [#allocation3], 1
    %132 = vsyncpa [#allocation6], 1
    %133 = vsyncpa [#allocation9], 1
    %134 = vsyncpa [#allocation4], 1

</llo_original>
